<compile_context>
chip_gen: v6e
topology: v6e:2x2x1
jax: 0.10.0
libtpu: 0.0.40
codegen_flags: <defaults>
</compile_context>

<pallas_src>
import jax
import jax.numpy as jnp
from jax.experimental import pallas as pl
from jax.experimental.pallas import tpu as pltpu

_SUBLANE = 8


def _round_up(n, m):
    return ((n + m - 1) // m) * m


def _leaky_relu_mlp_kernel(x_ref, w1_ref, b1_ref, w2_ref, b2_ref, o_ref):
    # Cast x to the weight dtype (bf16) in-register; x's DMA stays at its
    # native dtype so no extra HBM pass is paid for the cast.
    x = x_ref[...].astype(w1_ref.dtype)
    # fc1 on the MXU: bf16 operands, f32 accumulation; bias added in f32.
    h = jnp.dot(x, w1_ref[...], preferred_element_type=jnp.float32)
    h = h + b1_ref[...]
    # LeakyReLU(negative_slope=0.01): 1 vmul + 1 vmax on the VPU, in f32.
    h = jnp.maximum(h, 0.01 * h)
    # fc2: hidden activation back to bf16 for the MXU, accumulate in f32.
    out = jnp.dot(h.astype(w2_ref.dtype), w2_ref[...],
                  preferred_element_type=jnp.float32)
    # num_classes < 128 -> masked vst, but only the real lanes hit HBM.
    o_ref[...] = (out + b2_ref[...]).astype(o_ref.dtype)


def prepare_params(w1, b1, w2, b2, *, param_dtype=jnp.bfloat16):
    """One-time parameter prep (hoisted out of the per-call hot path).

    w1: (input_size, hidden_size)   -- transposed vs PyTorch nn.Linear
    b1: (hidden_size,)
    w2: (hidden_size, num_classes)  -- transposed vs PyTorch nn.Linear
    b2: (num_classes,)
    """
    return (w1.astype(param_dtype),
            b1.reshape(1, -1).astype(jnp.float32),
            w2.astype(param_dtype),
            b2.reshape(1, -1).astype(jnp.float32))


def leaky_relu_model(x, params, *, block_b=4096):
    """Forward pass of LeakyReLUModel.

    x      : (B, input_size), any float dtype (cast to bf16 inside the kernel)
    params : output of prepare_params()
    returns: (B, num_classes) float32
    """
    w1, b1_2d, w2, b2_2d = params
    B, in_f = x.shape
    hid = w1.shape[1]
    n_cls = w2.shape[1]

    # Balanced batch tiling:
    #   * at most block_b rows per tile,
    #   * >= 2 tiles when B is large so the "parallel" axis uses both TCs (v7x),
    #   * tb = round_up(cdiv(B, n_tiles), 8) -> at most 7 rows of padding.
    n_tiles = pl.cdiv(B, block_b)
    if B > 1024 and n_tiles < 2:
        n_tiles = 2
    tb = _round_up(pl.cdiv(B, n_tiles), _SUBLANE)
    b_p = n_tiles * tb

    xc = x
    if b_p != B:
        xc = jnp.pad(xc, ((0, b_p - B), (0, 0)))

    out = pl.pallas_call(
        _leaky_relu_mlp_kernel,
        out_shape=jax.ShapeDtypeStruct((b_p, n_cls), jnp.float32),
        grid_spec=pltpu.PrefetchScalarGridSpec(
            num_scalar_prefetch=0,
            grid=(n_tiles,),
            in_specs=[
                pl.BlockSpec((tb, in_f), lambda i: (i, 0)),     # x tile (pipelined)
                pl.BlockSpec((in_f, hid), lambda i: (0, 0)),    # w1 resident
                pl.BlockSpec((1, hid), lambda i: (0, 0)),       # b1 resident
                pl.BlockSpec((hid, n_cls), lambda i: (0, 0)),   # w2 resident
                pl.BlockSpec((1, n_cls), lambda i: (0, 0)),     # b2 resident
            ],
            out_specs=pl.BlockSpec((tb, n_cls), lambda i: (i, 0)),
        ),
        compiler_params=pltpu.CompilerParams(
            # Independent batch tiles -> shard across both TCs on v7x.
            dimension_semantics=("parallel",),
        ),
    )(xc, w1, b1_2d, w2, b2_2d)

    if b_p != B:
        out = out[:B]
    return out


def reference(x, w1, b1, w2, b2, *, param_dtype=jnp.bfloat16):
    """Pure-JAX reference mirroring the kernel's precision path
    (bf16 MXU operands, f32 accumulation, f32 bias add)."""
    h = jnp.dot(x.astype(param_dtype), w1.astype(param_dtype),
                preferred_element_type=jnp.float32) + b1
    h = jnp.where(h > 0, h, 0.01 * h)
    return jnp.dot(h.astype(param_dtype), w2.astype(param_dtype),
                   preferred_element_type=jnp.float32) + b2


if __name__ == "__main__":
    # Small shapes consistent with the module's forward.
    batch, input_size, hidden_size, num_classes = 8, 32, 64, 16

    key = jax.random.PRNGKey(0)
    kx, kw1, kb1, kw2, kb2 = jax.random.split(key, 5)

    x = jax.random.normal(kx, (batch, input_size), dtype=jnp.float32)

    # Deterministic parameter init (uniform, roughly PyTorch's default scale).
    bound1 = 1.0 / (input_size ** 0.5)
    w1 = jax.random.uniform(kw1, (input_size, hidden_size),
                            minval=-bound1, maxval=bound1, dtype=jnp.float32)
    b1 = jax.random.uniform(kb1, (hidden_size,),
                            minval=-bound1, maxval=bound1, dtype=jnp.float32)

    bound2 = 1.0 / (hidden_size ** 0.5)
    w2 = jax.random.uniform(kw2, (hidden_size, num_classes),
                            minval=-bound2, maxval=bound2, dtype=jnp.float32)
    b2 = jax.random.uniform(kb2, (num_classes,),
                            minval=-bound2, maxval=bound2, dtype=jnp.float32)

    # One-time parameter prep (bf16 weights, (1, N) f32 biases).
    params = prepare_params(w1, b1, w2, b2)

    fwd = jax.jit(leaky_relu_model)
    out = fwd(x, params)
    out = jax.block_until_ready(out)

    ref = reference(x, w1, b1, w2, b2)
    assert out.shape == (batch, num_classes)
    assert out.dtype == jnp.float32
    # bf16 operands / f32 accumulation on both sides -> differences are only
    # accumulation-order noise at K=32/64.
    assert jnp.allclose(out, ref, atol=1e-3, rtol=1e-3)

    print("KERNEL_OK")
</pallas_src>

<mosaic_0001>
module attributes {stable_mosaic.version = 11 : i64} {
  func.func @_leaky_relu_mlp_kernel(%arg0: i32, %arg1: memref<8x32xf32, #tpu.memory_space<vmem>>, %arg2: memref<32x64xbf16, #tpu.memory_space<vmem>>, %arg3: memref<1x64xf32, #tpu.memory_space<vmem>>, %arg4: memref<64x16xbf16, #tpu.memory_space<vmem>>, %arg5: memref<1x16xf32, #tpu.memory_space<vmem>>, %arg6: memref<8x16xf32, #tpu.memory_space<vmem>>) attributes {dimension_semantics = [#tpu.dimension_semantics<parallel>], iteration_bounds = array<i64: 1>, scalar_prefetch = 0 : i64, scratch_operands = 0 : i64, tpu.core_type = #tpu.core_type<tc>, window_params = [{transform_indices = @transform_0, window_bounds = array<i64: 8, 32>}, {pipeline_mode = #tpu.pipeline_mode<synchronous>, transform_indices = @transform_1, window_bounds = array<i64: 32, 64>}, {pipeline_mode = #tpu.pipeline_mode<synchronous>, transform_indices = @transform_2, window_bounds = array<i64: 1, 64>}, {pipeline_mode = #tpu.pipeline_mode<synchronous>, transform_indices = @transform_3, window_bounds = array<i64: 64, 16>}, {pipeline_mode = #tpu.pipeline_mode<synchronous>, transform_indices = @transform_4, window_bounds = array<i64: 1, 16>}, {transform_indices = @transform_5, window_bounds = array<i64: 8, 16>}]} {
    %c0 = arith.constant 0 : index
    %c0_0 = arith.constant 0 : index
    %0 = vector.load %arg1[%c0, %c0_0] : memref<8x32xf32, #tpu.memory_space<vmem>>, vector<8x32xf32>
    %1 = arith.truncf %0 : vector<8x32xf32> to vector<8x32xbf16>
    %c0_1 = arith.constant 0 : index
    %c0_2 = arith.constant 0 : index
    %2 = vector.load %arg2[%c0_1, %c0_2] : memref<32x64xbf16, #tpu.memory_space<vmem>>, vector<32x64xbf16>
    %cst = arith.constant dense<0.000000e+00> : vector<8x64xf32>
    %3 = tpu.matmul %1, %2, %cst {dimension_numbers = #tpu.dot_dimension_numbers<[1], [0], [0], [1], [0, 0, 1, 1], [], []>} : vector<8x32xbf16>, vector<32x64xbf16>, vector<8x64xf32> -> vector<8x64xf32>
    %c0_3 = arith.constant 0 : index
    %c0_4 = arith.constant 0 : index
    %4 = vector.load %arg3[%c0_3, %c0_4] : memref<1x64xf32, #tpu.memory_space<vmem>>, vector<1x64xf32>
    %5 = vector.broadcast %4 : vector<1x64xf32> to vector<8x64xf32>
    %6 = arith.addf %3, %5 : vector<8x64xf32>
    %cst_5 = arith.constant 0.00999999977 : f32
    %7 = vector.broadcast %cst_5 : f32 to vector<8x64xf32>
    %8 = arith.mulf %7, %6 : vector<8x64xf32>
    %9 = arith.maximumf %6, %8 : vector<8x64xf32>
    %10 = arith.truncf %9 : vector<8x64xf32> to vector<8x64xbf16>
    %c0_6 = arith.constant 0 : index
    %c0_7 = arith.constant 0 : index
    %11 = vector.load %arg4[%c0_6, %c0_7] : memref<64x16xbf16, #tpu.memory_space<vmem>>, vector<64x16xbf16>
    %cst_8 = arith.constant dense<0.000000e+00> : vector<8x16xf32>
    %12 = tpu.matmul %10, %11, %cst_8 {dimension_numbers = #tpu.dot_dimension_numbers<[1], [0], [0], [1], [0, 0, 1, 1], [], []>} : vector<8x64xbf16>, vector<64x16xbf16>, vector<8x16xf32> -> vector<8x16xf32>
    %c0_9 = arith.constant 0 : index
    %c0_10 = arith.constant 0 : index
    %13 = vector.load %arg5[%c0_9, %c0_10] : memref<1x16xf32, #tpu.memory_space<vmem>>, vector<1x16xf32>
    %14 = vector.broadcast %13 : vector<1x16xf32> to vector<8x16xf32>
    %15 = arith.addf %12, %14 : vector<8x16xf32>
    %c0_11 = arith.constant 0 : index
    %c0_12 = arith.constant 0 : index
    %16 = vector.load %arg6[%c0_11, %c0_12] : memref<8x16xf32, #tpu.memory_space<vmem>>, vector<8x16xf32>
    tpu.vector_store %arg6[%c0_11, %c0_12], %15 {strides = array<i32>} : memref<8x16xf32, #tpu.memory_space<vmem>>, vector<8x16xf32>,
    return
  }
  func.func @transform_0(%arg0: i32) -> (i32, i32) {
    %c0_i32 = arith.constant 0 : i32
    %c0_i32_0 = arith.constant 0 : i32
    return %arg0, %c0_i32 : i32, i32
  }
  func.func @transform_1(%arg0: i32) -> (i32, i32) {
    %c0_i32 = arith.constant 0 : i32
    %c0_i32_0 = arith.constant 0 : i32
    %c0_i32_1 = arith.constant 0 : i32
    return %c0_i32, %c0_i32_0 : i32, i32
  }
  func.func @transform_2(%arg0: i32) -> (i32, i32) {
    %c0_i32 = arith.constant 0 : i32
    %c0_i32_0 = arith.constant 0 : i32
    %c0_i32_1 = arith.constant 0 : i32
    return %c0_i32, %c0_i32_0 : i32, i32
  }
  func.func @transform_3(%arg0: i32) -> (i32, i32) {
    %c0_i32 = arith.constant 0 : i32
    %c0_i32_0 = arith.constant 0 : i32
    %c0_i32_1 = arith.constant 0 : i32
    return %c0_i32, %c0_i32_0 : i32, i32
  }
  func.func @transform_4(%arg0: i32) -> (i32, i32) {
    %c0_i32 = arith.constant 0 : i32
    %c0_i32_0 = arith.constant 0 : i32
    %c0_i32_1 = arith.constant 0 : i32
    return %c0_i32, %c0_i32_0 : i32, i32
  }
  func.func @transform_5(%arg0: i32) -> (i32, i32) {
    %c0_i32 = arith.constant 0 : i32
    %c0_i32_0 = arith.constant 0 : i32
    return %arg0, %c0_i32 : i32, i32
  }
}

</mosaic_0001>

<llo_original>
// kernel: leaky_relu_model.1
$region0: #{leaky_relu_model.1}
  #allocation0 [shape = 'u32[]', space=smem, size = 0x4, offset = 0x4, fixed_abs, tag = 'smem constant byte address 0x4 - core index']
  #allocation1 [shape = 'u32[144,128]{1,0:T(1,128)}', space=vmem, size = 0x12000, scoped, tag = 'internal scratch']
  %s0 = inlined_call_operand.vmem [shape: f32[8,32], index: 0, kind: input, shape index: {}]
  %s1 = inlined_call_operand.vmem [shape: bf16[32,64], index: 1, kind: input, shape index: {}]
  %s2 = inlined_call_operand.vmem [shape: f32[1,64], index: 2, kind: input, shape index: {}]
  %s3 = inlined_call_operand.vmem [shape: bf16[64,16], index: 3, kind: input, shape index: {}]
  %s4 = inlined_call_operand.vmem [shape: f32[1,16], index: 4, kind: input, shape index: {}]
  %s5 = inlined_call_operand.hbm [shape: f32[8,16], index: 5, kind: output, shape index: {}]
  %s6 = sld [smem:[#allocation0]]
  $region30: #{leaky_relu_model.1} parent=0
    _
  %s8 = ssub.s32 1, %s6
  %s9 = scalar_select 0, %s8, %s6
  $region1: #{leaky_relu_model.1} parent=0
    #allocation2 [shape = 'u8[4096]{0}', space=vmem, size = 0x1000, scoped, tag = 'output window, operand 0, single buffered']
    #allocation3 [shape = 's32[1]{0}', space=sflag, size = 0x4, scoped, tag = 'scoped memory for leaky_relu_model.1']
    %10 = vsyncpa [#allocation3], 0
    // Predicated region
    $region2: #{leaky_relu_model.1} parent=1 // pred_check
      _
    $region3: #{leaky_relu_model.1} parent=1 // pred_check_branch
      %12 = sbr.rel (0) target = $region5
    $region4: #{leaky_relu_model.1} parent=1 // pred_region
      _
    $region5: #{leaky_relu_model.1} parent=1 // pred_fallthru
      _
    // Predicated region
    $region6: #{leaky_relu_model.1} parent=1 // pred_check
      _
    $region7: #{leaky_relu_model.1} parent=1 // pred_check_branch
      %14 = sbr.rel (0) target = $region9
    $region8: #{leaky_relu_model.1} parent=1 // pred_region
      _
    $region9: #{leaky_relu_model.1} parent=1 // pred_fallthru
      _
    // Predicated region
    $region10: #{leaky_relu_model.1} parent=1 // pred_check
      _
    $region11: #{leaky_relu_model.1} parent=1 // pred_check_branch
      %16 = sbr.rel (0) target = $region13
    $region12: #{leaky_relu_model.1} parent=1 // pred_region
      _
    $region13: #{leaky_relu_model.1} parent=1 // pred_fallthru
      _
    // Predicated region
    $region14: #{leaky_relu_model.1} parent=1 // pred_check
      _
    $region15: #{leaky_relu_model.1} parent=1 // pred_check_branch
      %18 = sbr.rel (0) target = $region17
    $region16: #{leaky_relu_model.1} parent=1 // pred_region
      _
    $region17: #{leaky_relu_model.1} parent=1 // pred_fallthru
      _
    // Predicated region
    $region18: #{leaky_relu_model.1} parent=1 // pred_check
      _
    $region19: #{leaky_relu_model.1} parent=1 // pred_check_branch
      %20 = sbr.rel (0) target = $region21
    $region20: #{leaky_relu_model.1} parent=1 // pred_region
      _
    $region21: #{leaky_relu_model.1} parent=1 // pred_fallthru
      _
    %v22 = vld [vmem:[%s0] sm:$0xff]
    %v23 = vpack.c.bf16 %v22, %v22
    %v24 = vld [vmem:[%s1] sm:$0xf]
    %v25 = vld [vmem:[%s1 + $0x4] sm:$0xf]
    %v26 = vld [vmem:[%s1 + $0x8] sm:$0xf]
    %v27 = vld [vmem:[%s1 + $0xc] sm:$0xf]
    %v28 = vld [vmem:[%s2] sm:$0x1]
    %v30 = vlaneseq
    %v31 = vshrl.u32 %v30, 7
    %v32 = vsub.s32 0, %v31
    %v33 = vrot.slane %v28, %v32
    %v39 = vunpack.c.l.b16 %v24
    %v40 = vunpack.c.l.b16 %v25
    %v41 = vunpack.c.l.b16 %v26
    %v42 = vunpack.c.l.b16 %v27
    %v43 = vpack.c.b16 %v40, %v39
    %v44 = vpack.c.b16 %v42, %v41
    %vm47 = vcmask 261120
    %v49 = vsel %vm47, %v23, 0
    %51 = vmatprep.subr.bf16.mxu0 0
    %52 = vmatpush1.bf16.msra.mxu0 0
    %53 = vmatprep.subr.bf16.mxu0 0
    %54 = vmatpush1.bf16.msra.mxu0 0
    %55 = vmatprep.subr.bf16.mxu0 0
    %56 = vmatpush1.bf16.msra.mxu0 0
    %57 = vmatprep.subr.bf16.mxu0 0
    %58 = vmatpush1.bf16.msra.mxu0 0
    %59 = vmatprep.subr.bf16.mxu0 0
    %60 = vmatpush1.bf16.msra.mxu0 0
    %61 = vmatprep.subr.bf16.mxu0 0
    %62 = vmatpush1.bf16.msra.mxu0 0
    %63 = vmatprep.subr.bf16.mxu0 0
    %64 = vmatpush1.bf16.msra.mxu0 %v44
    %65 = vmatprep.subr.bf16.mxu0 0
    %66 = vmatpush1.bf16.msra.mxu0 %v43
    %67 = vmatprep.subr.bf16.mxu0 0
    %68 = vmatpush2.bf16.msra.mxu0 0
    %69 = vmatprep.subr.bf16.mxu0 0
    %70 = vmatpush2.bf16.msra.mxu0 0
    %71 = vmatprep.subr.bf16.mxu0 0
    %72 = vmatpush2.bf16.msra.mxu0 0
    %73 = vmatprep.subr.bf16.mxu0 0
    %74 = vmatpush2.bf16.msra.mxu0 0
    %75 = vmatprep.subr.bf16.mxu0 0
    %76 = vmatpush2.bf16.msra.mxu0 0
    %77 = vmatprep.subr.bf16.mxu0 0
    %78 = vmatpush2.bf16.msra.mxu0 0
    %79 = vmatprep.subr.bf16.mxu0 0
    %80 = vmatpush2.bf16.msra.mxu0 0
    %81 = vmatprep.subr.bf16.mxu0 0
    %82 = vmatpush2.bf16.msra.mxu0 0
    %83 = vmatprep.mubr.bf16.mxu0 0
    %84 = vmatmul.mubr.bf16.gmra.mxu0 %v49
    %v85 = vpop.f32.mrf.mxu0
    %v86 = vadd.f32 %v33, %v85
    %v87 = vpop.f32.mrf.mxu0
    %v88 = vpop.f32.mrf.mxu0
    %v89 = vpop.f32.mrf.mxu0
    %90 = vdwg.mxu0
    %v91 = vmul.f32 %v86, 0.01
    %v92 = vmax.f32 %v86, %v91
    %v93 = vpack.c.bf16 %v92, %v92
    %v94 = vld [vmem:[%s3] sm:$0xf]
    %v95 = vld [vmem:[%s3 + $0x4] sm:$0xf]
    %v96 = vld [vmem:[%s3 + $0x8] sm:$0xf]
    %v97 = vld [vmem:[%s3 + $0xc] sm:$0xf]
    %v98 = vld [vmem:[%s3 + $0x10] sm:$0xf]
    %v99 = vld [vmem:[%s3 + $0x14] sm:$0xf]
    %v100 = vld [vmem:[%s3 + $0x18] sm:$0xf]
    %v101 = vld [vmem:[%s3 + $0x1c] sm:$0xf]
    %v102 = vld [vmem:[%s4] sm:$0x1]
    %v104 = vlaneseq
    %v105 = vshrl.u32 %v104, 7
    %v106 = vsub.s32 0, %v105
    %v107 = vrot.slane %v102, %v106
    %v117 = vunpack.c.l.b16 %v94
    %v118 = vunpack.c.l.b16 %v95
    %v119 = vunpack.c.l.b16 %v96
    %v120 = vunpack.c.l.b16 %v97
    %v121 = vunpack.c.l.b16 %v98
    %v122 = vunpack.c.l.b16 %v99
    %v123 = vunpack.c.l.b16 %v100
    %v124 = vunpack.c.l.b16 %v101
    %v125 = vpack.c.b16 %v118, %v117
    %v126 = vpack.c.b16 %v120, %v119
    %v127 = vpack.c.b16 %v122, %v121
    %v128 = vpack.c.b16 %v124, %v123
    %vm133 = vcmask 523264
    %v135 = vsel %vm133, %v93, 0
    %137 = vmatprep.subr.bf16.mxu0 0
    %138 = vmatpush1.bf16.msra.mxu0 0
    %139 = vmatprep.subr.bf16.mxu0 0
    %140 = vmatpush1.bf16.msra.mxu0 0
    %141 = vmatprep.subr.bf16.mxu0 0
    %142 = vmatpush1.bf16.msra.mxu0 0
    %143 = vmatprep.subr.bf16.mxu0 0
    %144 = vmatpush1.bf16.msra.mxu0 0
    %145 = vmatprep.subr.bf16.mxu0 0
    %146 = vmatpush1.bf16.msra.mxu0 %v128
    %147 = vmatprep.subr.bf16.mxu0 0
    %148 = vmatpush1.bf16.msra.mxu0 %v127
    %149 = vmatprep.subr.bf16.mxu0 0
    %150 = vmatpush1.bf16.msra.mxu0 %v126
    %151 = vmatprep.subr.bf16.mxu0 0
    %152 = vmatpush1.bf16.msra.mxu0 %v125
    %153 = vmatprep.subr.bf16.mxu0 0
    %154 = vmatpush2.bf16.msra.mxu0 0
    %155 = vmatprep.subr.bf16.mxu0 0
    %156 = vmatpush2.bf16.msra.mxu0 0
    %157 = vmatprep.subr.bf16.mxu0 0
    %158 = vmatpush2.bf16.msra.mxu0 0
    %159 = vmatprep.subr.bf16.mxu0 0
    %160 = vmatpush2.bf16.msra.mxu0 0
    %161 = vmatprep.subr.bf16.mxu0 0
    %162 = vmatpush2.bf16.msra.mxu0 0
    %163 = vmatprep.subr.bf16.mxu0 0
    %164 = vmatpush2.bf16.msra.mxu0 0
    %165 = vmatprep.subr.bf16.mxu0 0
    %166 = vmatpush2.bf16.msra.mxu0 0
    %167 = vmatprep.subr.bf16.mxu0 0
    %168 = vmatpush2.bf16.msra.mxu0 0
    %169 = vmatprep.mubr.bf16.mxu0 0
    %170 = vmatmul.mubr.bf16.gmra.mxu0 %v135
    %v171 = vpop.f32.mrf.mxu0
    %v172 = vadd.f32 %v107, %v171
    %v173 = vpop.f32.mrf.mxu0
    %v174 = vpop.f32.mrf.mxu0
    %v175 = vpop.f32.mrf.mxu0
    %176 = vdwg.mxu0
    %vm177 = vcmask 130048
    %178 = vst.msk [vmem:[#allocation2] sm:$0xff] %vm177, %v172
    // Predicated region
    $region22: #{leaky_relu_model.1} parent=1 // pred_check
      _
    $region23: #{leaky_relu_model.1} parent=1 // pred_check_branch
      %180 = sbr.rel (0) target = $region25
    $region24: #{leaky_relu_model.1} parent=1 // pred_region
      %s182 = ssub.s32 128, 128
      %183 = vsyncadd [#allocation3], %s182
      %s185 = sshll.u32 [#allocation2], 4
      %s186 = int_to_ptr.vmem [resolvable:$true] %s185
      %188 = dma.vmem_to_hbm [thread:$0]  %s186, 128, %s5, [#allocation3]
    $region25: #{leaky_relu_model.1} parent=1 // pred_fallthru
      _
    // Predicated region
    $region26: #{leaky_relu_model.1} parent=1 // pred_check
      _
    $region27: #{leaky_relu_model.1} parent=1 // pred_check_branch
      %190 = sbr.rel (0) target = $region29
    $region28: #{leaky_relu_model.1} parent=1 // pred_region
      %191 = dma.done [#allocation3], 128
    $region29: #{leaky_relu_model.1} parent=1 // pred_fallthru
      _
    %192 = vsyncpa [#allocation3], 1

</llo_original>
